<compile_context>
chip_gen: v7x
topology: tpu7x:2x2x1
jax: 0.10.0
libtpu: 0.0.40
codegen_flags: <defaults>
</compile_context>

<pallas_src>
import functools

import jax
import jax.numpy as jnp
from jax.experimental import pallas as pl
from jax.experimental.pallas import tpu as pltpu

BN_EPS = 1e-5


def _mlp2_kernel(x_ref, w1_ref, b1_ref, w2_ref, b2_ref, o_ref):
    """Fused 2-layer MLP (BN already folded into W/b): Linear -> ReLU -> Linear."""
    x = x_ref[...]
    h = jnp.dot(x, w1_ref[...], preferred_element_type=jnp.float32) + b1_ref[...]
    h = jnp.maximum(h, 0.0)
    # dropout(p=0.5) is identity in eval mode.
    y = jnp.dot(h, w2_ref[...], preferred_element_type=jnp.float32) + b2_ref[...]
    o_ref[...] = y.astype(o_ref.dtype)


def _round_up(n, m):
    return ((n + m - 1) // m) * m


def _fold_bn(w_t, b, gamma, beta, mean, var):
    """Fold an eval-mode BatchNorm1d into a linear layer (w_t is [in, out])."""
    scale = gamma * jax.lax.rsqrt(var + BN_EPS)              # [out]
    w_f = w_t * scale[None, :]                               # column-scaled
    b_f = (b - mean) * scale + beta
    return w_f.astype(jnp.float32), b_f.astype(jnp.float32)


@functools.partial(jax.jit, static_argnames=("tile_m",))
def triples_mlp_forward(x, params, *, tile_m=256):
    """TriplesMLP forward: phi applied to each half of x (split on dim 1), concat.

    Implemented with block-diagonal (BN-folded) weights so a single pallas_call on
    x[N, C] produces the full [N, 2*O] output with no wrapper-side concats.
    """
    N, C = x.shape
    D = C // 2
    H = params["w1"].shape[0]          # hidden_channels  (torch layout [H, D])
    O = params["w2"].shape[0]          # out_channels     (torch layout [O, H])

    # ---- fold eval-mode BN into the linear layers (tiny, done outside the kernel) --
    w1f, b1f = _fold_bn(params["w1"].T, params["b1"], params["gamma1"],
                        params["beta1"], params["mean1"], params["var1"])  # [D,H],[H]
    w2f, b2f = _fold_bn(params["w2"].T, params["b2"], params["gamma2"],
                        params["beta2"], params["mean2"], params["var2"])  # [H,O],[O]

    # ---- block-diagonal weights: one matmul handles both halves of x --------------
    zdh = jnp.zeros((D, H), jnp.float32)
    zho = jnp.zeros((H, O), jnp.float32)
    w1_blk = jnp.block([[w1f, zdh], [zdh, w1f]])             # [2D, 2H]
    w2_blk = jnp.block([[w2f, zho], [zho, w2f]])             # [2H, 2O]
    b1_blk = jnp.concatenate([b1f, b1f]).reshape(1, 2 * H)   # [1, 2H]
    b2_blk = jnp.concatenate([b2f, b2f]).reshape(1, 2 * O)   # [1, 2O]

    # ---- row tiling: big tiles, pad rows to a multiple of the tile -----------------
    tm = min(tile_m, max(8, _round_up(N, 8)))
    M = _round_up(N, tm)
    x_p = x.astype(jnp.float32)
    if M != N:
        x_p = jnp.pad(x_p, ((0, M - N), (0, 0)))

    full2d = lambda r, c: pl.BlockSpec((r, c), lambda i: (0, 0))

    out = pl.pallas_call(
        _mlp2_kernel,
        out_shape=jax.ShapeDtypeStruct((M, 2 * O), jnp.float32),
        grid_spec=pl.GridSpec(
            grid=(M // tm,),
            in_specs=[
                pl.BlockSpec((tm, C), lambda i: (i, 0)),     # x rows
                full2d(2 * D, 2 * H),                        # W1 (block-diag)
                full2d(1, 2 * H),                            # b1
                full2d(2 * H, 2 * O),                        # W2 (block-diag)
                full2d(1, 2 * O),                            # b2
            ],
            out_specs=pl.BlockSpec((tm, 2 * O), lambda i: (i, 0)),
        ),
        compiler_params=pltpu.CompilerParams(
            dimension_semantics=("parallel",)),
    )(x_p, w1_blk, b1_blk, w2_blk, b2_blk)

    return out[:N]


def init_params(key, in_channels, hidden_channels, out_channels):
    """Deterministic synthetic parameters matching the torch module's shapes."""
    D = in_channels // 2
    O = out_channels if out_channels is not None else hidden_channels
    ks = jax.random.split(key, 8)
    return {
        # nn.Linear(D, hidden): weight [hidden, D], bias [hidden]
        "w1": 0.1 * jax.random.normal(ks[0], (hidden_channels, D), jnp.float32),
        "b1": 0.1 * jax.random.normal(ks[1], (hidden_channels,), jnp.float32),
        # nn.Linear(hidden, O): weight [O, hidden], bias [O]
        "w2": 0.1 * jax.random.normal(ks[2], (O, hidden_channels), jnp.float32),
        "b2": 0.1 * jax.random.normal(ks[3], (O,), jnp.float32),
        # BatchNorm1d(hidden) — eval-mode running stats + affine params
        "gamma1": 1.0 + 0.05 * jax.random.normal(ks[4], (hidden_channels,), jnp.float32),
        "beta1": 0.05 * jax.random.normal(ks[5], (hidden_channels,), jnp.float32),
        "mean1": 0.02 * jnp.arange(hidden_channels, dtype=jnp.float32),
        "var1": 1.0 + 0.01 * jnp.arange(hidden_channels, dtype=jnp.float32),
        # BatchNorm1d(O)
        "gamma2": 1.0 + 0.05 * jax.random.normal(ks[6], (O,), jnp.float32),
        "beta2": 0.05 * jax.random.normal(ks[7], (O,), jnp.float32),
        "mean2": 0.01 * jnp.arange(O, dtype=jnp.float32),
        "var2": 1.0 + 0.02 * jnp.arange(O, dtype=jnp.float32),
    }


def _reference(x, params):
    """Plain-JAX reference of the same eval-mode forward (unfused BN)."""
    def phi(z):
        h = z @ params["w1"].T + params["b1"]
        h = (h - params["mean1"]) * (params["gamma1"] /
                                     jnp.sqrt(params["var1"] + BN_EPS)) + params["beta1"]
        h = jnp.maximum(h, 0.0)
        y = h @ params["w2"].T + params["b2"]
        y = (y - params["mean2"]) * (params["gamma2"] /
                                     jnp.sqrt(params["var2"] + BN_EPS)) + params["beta2"]
        return y

    D = x.shape[1] // 2
    return jnp.concatenate([phi(x[:, :D]), phi(x[:, D:])], axis=1)


if __name__ == "__main__":
    key = jax.random.PRNGKey(0)
    k_x, k_p = jax.random.split(key)

    batch = 8
    in_channels = 64          # TriplesMLP splits this in half -> phi input dim 32
    hidden_channels = 32
    out_channels = None       # defaults to hidden_channels

    x = jax.random.normal(k_x, (batch, in_channels), jnp.float32)
    params = init_params(k_p, in_channels, hidden_channels, out_channels)

    out = triples_mlp_forward(x, params)
    out = jax.block_until_ready(out)

    ref = _reference(x, params)
    assert out.shape == (batch, 2 * hidden_channels), out.shape
    assert jnp.allclose(out, ref, atol=1e-4, rtol=1e-4), float(jnp.max(jnp.abs(out - ref)))

    print("KERNEL_OK")
</pallas_src>

<mosaic_0001>
module attributes {stable_mosaic.version = 11 : i64} {
  func.func @_mlp2_kernel(%arg0: i32, %arg1: memref<8x64xf32, #tpu.memory_space<vmem>>, %arg2: memref<64x64xf32, #tpu.memory_space<vmem>>, %arg3: memref<1x64xf32, #tpu.memory_space<vmem>>, %arg4: memref<64x64xf32, #tpu.memory_space<vmem>>, %arg5: memref<1x64xf32, #tpu.memory_space<vmem>>, %arg6: memref<8x64xf32, #tpu.memory_space<vmem>>) attributes {dimension_semantics = [#tpu.dimension_semantics<parallel>], iteration_bounds = array<i64: 1>, scalar_prefetch = 0 : i64, scratch_operands = 0 : i64, tpu.core_type = #tpu.core_type<tc>, window_params = [{transform_indices = @transform_0, window_bounds = array<i64: 8, 64>}, {pipeline_mode = #tpu.pipeline_mode<synchronous>, transform_indices = @transform_1, window_bounds = array<i64: 64, 64>}, {pipeline_mode = #tpu.pipeline_mode<synchronous>, transform_indices = @transform_2, window_bounds = array<i64: 1, 64>}, {pipeline_mode = #tpu.pipeline_mode<synchronous>, transform_indices = @transform_3, window_bounds = array<i64: 64, 64>}, {pipeline_mode = #tpu.pipeline_mode<synchronous>, transform_indices = @transform_4, window_bounds = array<i64: 1, 64>}, {transform_indices = @transform_5, window_bounds = array<i64: 8, 64>}]} {
    %c0 = arith.constant 0 : index
    %c0_0 = arith.constant 0 : index
    %0 = vector.load %arg1[%c0, %c0_0] : memref<8x64xf32, #tpu.memory_space<vmem>>, vector<8x64xf32>
    %c0_1 = arith.constant 0 : index
    %c0_2 = arith.constant 0 : index
    %1 = vector.load %arg2[%c0_1, %c0_2] : memref<64x64xf32, #tpu.memory_space<vmem>>, vector<64x64xf32>
    %cst = arith.constant dense<0.000000e+00> : vector<8x64xf32>
    %2 = tpu.matmul %0, %1, %cst {dimension_numbers = #tpu.dot_dimension_numbers<[1], [0], [0], [1], [0, 0, 1, 1], [], []>} : vector<8x64xf32>, vector<64x64xf32>, vector<8x64xf32> -> vector<8x64xf32>
    %c0_3 = arith.constant 0 : index
    %c0_4 = arith.constant 0 : index
    %3 = vector.load %arg3[%c0_3, %c0_4] : memref<1x64xf32, #tpu.memory_space<vmem>>, vector<1x64xf32>
    %4 = vector.broadcast %3 : vector<1x64xf32> to vector<8x64xf32>
    %5 = arith.addf %2, %4 : vector<8x64xf32>
    %cst_5 = arith.constant 0.000000e+00 : f32
    %6 = vector.broadcast %cst_5 : f32 to vector<8x64xf32>
    %7 = arith.maximumf %5, %6 : vector<8x64xf32>
    %c0_6 = arith.constant 0 : index
    %c0_7 = arith.constant 0 : index
    %8 = vector.load %arg4[%c0_6, %c0_7] : memref<64x64xf32, #tpu.memory_space<vmem>>, vector<64x64xf32>
    %cst_8 = arith.constant dense<0.000000e+00> : vector<8x64xf32>
    %9 = tpu.matmul %7, %8, %cst_8 {dimension_numbers = #tpu.dot_dimension_numbers<[1], [0], [0], [1], [0, 0, 1, 1], [], []>} : vector<8x64xf32>, vector<64x64xf32>, vector<8x64xf32> -> vector<8x64xf32>
    %c0_9 = arith.constant 0 : index
    %c0_10 = arith.constant 0 : index
    %10 = vector.load %arg5[%c0_9, %c0_10] : memref<1x64xf32, #tpu.memory_space<vmem>>, vector<1x64xf32>
    %11 = vector.broadcast %10 : vector<1x64xf32> to vector<8x64xf32>
    %12 = arith.addf %9, %11 : vector<8x64xf32>
    %c0_11 = arith.constant 0 : index
    %c0_12 = arith.constant 0 : index
    %13 = vector.load %arg6[%c0_11, %c0_12] : memref<8x64xf32, #tpu.memory_space<vmem>>, vector<8x64xf32>
    tpu.vector_store %arg6[%c0_11, %c0_12], %12 {strides = array<i32>} : memref<8x64xf32, #tpu.memory_space<vmem>>, vector<8x64xf32>,
    return
  }
  func.func @transform_0(%arg0: i32) -> (i32, i32) {
    %c0_i32 = arith.constant 0 : i32
    %c0_i32_0 = arith.constant 0 : i32
    return %arg0, %c0_i32 : i32, i32
  }
  func.func @transform_1(%arg0: i32) -> (i32, i32) {
    %c0_i32 = arith.constant 0 : i32
    %c0_i32_0 = arith.constant 0 : i32
    %c0_i32_1 = arith.constant 0 : i32
    return %c0_i32, %c0_i32_0 : i32, i32
  }
  func.func @transform_2(%arg0: i32) -> (i32, i32) {
    %c0_i32 = arith.constant 0 : i32
    %c0_i32_0 = arith.constant 0 : i32
    %c0_i32_1 = arith.constant 0 : i32
    return %c0_i32, %c0_i32_0 : i32, i32
  }
  func.func @transform_3(%arg0: i32) -> (i32, i32) {
    %c0_i32 = arith.constant 0 : i32
    %c0_i32_0 = arith.constant 0 : i32
    %c0_i32_1 = arith.constant 0 : i32
    return %c0_i32, %c0_i32_0 : i32, i32
  }
  func.func @transform_4(%arg0: i32) -> (i32, i32) {
    %c0_i32 = arith.constant 0 : i32
    %c0_i32_0 = arith.constant 0 : i32
    %c0_i32_1 = arith.constant 0 : i32
    return %c0_i32, %c0_i32_0 : i32, i32
  }
  func.func @transform_5(%arg0: i32) -> (i32, i32) {
    %c0_i32 = arith.constant 0 : i32
    %c0_i32_0 = arith.constant 0 : i32
    return %arg0, %c0_i32 : i32, i32
  }
}

</mosaic_0001>

<llo_original>
// kernel: triples_mlp_forward.1
$region0: #{triples_mlp_forward.1}
  #allocation0 [shape = 'u32[]', space=smem, size = 0x4, offset = 0x4, fixed_abs, tag = 'smem constant byte address 0x4 - core index']
  #allocation1 [shape = 'u32[144,128]{1,0:T(1,128)}', space=vmem, size = 0x12000, scoped, tag = 'internal scratch']
  %s0 = inlined_call_operand.vmem [shape: f32[8,64], index: 0, kind: input, shape index: {}]
  %s1 = inlined_call_operand.vmem [shape: f32[64,64], index: 1, kind: input, shape index: {}]
  %s2 = inlined_call_operand.vmem [shape: f32[1,64], index: 2, kind: input, shape index: {}]
  %s3 = inlined_call_operand.vmem [shape: f32[64,64], index: 3, kind: input, shape index: {}]
  %s4 = inlined_call_operand.vmem [shape: f32[1,64], index: 4, kind: input, shape index: {}]
  %s5 = inlined_call_operand.hbm [shape: f32[8,64], index: 5, kind: output, shape index: {}]
  %s6 = sld [smem:[#allocation0]]
  $region30: #{triples_mlp_forward.1} parent=0
    _
  %s8 = ssub.s32 1, %s6
  %s9 = scalar_select 0, %s8, %s6
  $region1: #{triples_mlp_forward.1} parent=0
    #allocation2 [shape = 'u8[4096]{0}', space=vmem, size = 0x1000, scoped, tag = 'output window, operand 0, single buffered']
    #allocation3 [shape = 's32[1]{0}', space=sflag, size = 0x4, scoped, tag = 'scoped memory for triples_mlp_forward.1']
    %10 = vsyncpa [#allocation3], 0
    // Predicated region
    $region2: #{triples_mlp_forward.1} parent=1 // pred_check
      _
    $region3: #{triples_mlp_forward.1} parent=1 // pred_check_branch
      %12 = sbr.rel (0) target = $region5
    $region4: #{triples_mlp_forward.1} parent=1 // pred_region
      _
    $region5: #{triples_mlp_forward.1} parent=1 // pred_fallthru
      _
    // Predicated region
    $region6: #{triples_mlp_forward.1} parent=1 // pred_check
      _
    $region7: #{triples_mlp_forward.1} parent=1 // pred_check_branch
      %14 = sbr.rel (0) target = $region9
    $region8: #{triples_mlp_forward.1} parent=1 // pred_region
      _
    $region9: #{triples_mlp_forward.1} parent=1 // pred_fallthru
      _
    // Predicated region
    $region10: #{triples_mlp_forward.1} parent=1 // pred_check
      _
    $region11: #{triples_mlp_forward.1} parent=1 // pred_check_branch
      %16 = sbr.rel (0) target = $region13
    $region12: #{triples_mlp_forward.1} parent=1 // pred_region
      _
    $region13: #{triples_mlp_forward.1} parent=1 // pred_fallthru
      _
    // Predicated region
    $region14: #{triples_mlp_forward.1} parent=1 // pred_check
      _
    $region15: #{triples_mlp_forward.1} parent=1 // pred_check_branch
      %18 = sbr.rel (0) target = $region17
    $region16: #{triples_mlp_forward.1} parent=1 // pred_region
      _
    $region17: #{triples_mlp_forward.1} parent=1 // pred_fallthru
      _
    // Predicated region
    $region18: #{triples_mlp_forward.1} parent=1 // pred_check
      _
    $region19: #{triples_mlp_forward.1} parent=1 // pred_check_branch
      %20 = sbr.rel (0) target = $region21
    $region20: #{triples_mlp_forward.1} parent=1 // pred_region
      _
    $region21: #{triples_mlp_forward.1} parent=1 // pred_fallthru
      _
    %v21 = vld [vmem:[%s0] sm:$0xff]
    %v22 = vld [vmem:[%s1] sm:$0xff]
    %v23 = vld [vmem:[%s1 + $0x8] sm:$0xff]
    %v24 = vld [vmem:[%s1 + $0x10] sm:$0xff]
    %v25 = vld [vmem:[%s1 + $0x18] sm:$0xff]
    %v26 = vld [vmem:[%s1 + $0x20] sm:$0xff]
    %v27 = vld [vmem:[%s1 + $0x28] sm:$0xff]
    %v28 = vld [vmem:[%s1 + $0x30] sm:$0xff]
    %v29 = vld [vmem:[%s1 + $0x38] sm:$0xff]
    %v30 = vld [vmem:[%s2] sm:$0x1]
    %v32 = vlaneseq
    %v33 = vshrl.u32 %v32, 7
    %v34 = vsub.s32 0, %v33
    %v35 = vrot.slane %v30, %v34
    %vm37 = vcmask 523264
    %v39 = vsel %vm37, %v21, 0
    %41 = vmatprep.subr.mxu0 0.0
    %42 = vmatpush1.msra.mxu0 %v22
    %43 = vmatprep.subr.mxu0 0.0
    %44 = vmatpush1.msra.mxu0 %v23
    %45 = vmatprep.subr.mxu0 0.0
    %46 = vmatpush1.msra.mxu0 %v24
    %47 = vmatprep.subr.mxu0 0.0
    %48 = vmatpush1.msra.mxu0 %v25
    %49 = vmatprep.subr.mxu0 0.0
    %50 = vmatpush1.msra.mxu0 %v26
    %51 = vmatprep.subr.mxu0 0.0
    %52 = vmatpush1.msra.mxu0 %v27
    %53 = vmatprep.subr.mxu0 0.0
    %54 = vmatpush1.msra.mxu0 %v28
    %55 = vmatprep.subr.mxu0 0.0
    %56 = vmatpush1.msra.mxu0 %v29
    %57 = vmatprep.subr.mxu0 0.0
    %58 = vmatpush1.msra.mxu0 0.0
    %59 = vmatprep.subr.mxu0 0.0
    %60 = vmatpush1.msra.mxu0 0.0
    %61 = vmatprep.subr.mxu0 0.0
    %62 = vmatpush1.msra.mxu0 0.0
    %63 = vmatprep.subr.mxu0 0.0
    %64 = vmatpush1.msra.mxu0 0.0
    %65 = vmatprep.subr.mxu0 0.0
    %66 = vmatpush1.msra.mxu0 0.0
    %67 = vmatprep.subr.mxu0 0.0
    %68 = vmatpush1.msra.mxu0 0.0
    %69 = vmatprep.subr.mxu0 0.0
    %70 = vmatpush1.msra.mxu0 0.0
    %71 = vmatprep.subr.mxu0 0.0
    %72 = vmatpush1.msra.mxu0 0.0
    %73 = vmatprep.subr.mxu0 0.0
    %74 = vmatpush1.msra.mxu0 0.0
    %75 = vmatprep.subr.mxu0 0.0
    %76 = vmatpush1.msra.mxu0 0.0
    %77 = vmatprep.subr.mxu0 0.0
    %78 = vmatpush1.msra.mxu0 0.0
    %79 = vmatprep.subr.mxu0 0.0
    %80 = vmatpush1.msra.mxu0 0.0
    %81 = vmatprep.subr.mxu0 0.0
    %82 = vmatpush1.msra.mxu0 0.0
    %83 = vmatprep.subr.mxu0 0.0
    %84 = vmatpush1.msra.mxu0 0.0
    %85 = vmatprep.subr.mxu0 0.0
    %86 = vmatpush1.msra.mxu0 0.0
    %87 = vmatprep.subr.mxu0 0.0
    %88 = vmatpush1.msra.mxu0 0.0
    %89 = vmatprep.subr.mxu0 0.0
    %90 = vmatpush1.msra.mxu0 0.0
    %91 = vmatprep.subr.mxu0 0.0
    %92 = vmatpush1.msra.mxu0 0.0
    %93 = vmatprep.subr.mxu0 0.0
    %94 = vmatpush1.msra.mxu0 0.0
    %95 = vmatprep.subr.mxu0 0.0
    %96 = vmatpush1.msra.mxu0 0.0
    %97 = vmatprep.subr.mxu0 0.0
    %98 = vmatpush1.msra.mxu0 0.0
    %99 = vmatprep.subr.mxu0 0.0
    %100 = vmatpush1.msra.mxu0 0.0
    %101 = vmatprep.subr.mxu0 0.0
    %102 = vmatpush1.msra.mxu0 0.0
    %103 = vmatprep.subr.mxu0 0.0
    %104 = vmatpush1.msra.mxu0 0.0
    %105 = vmatprep.mubr.f32.mxu0 0.0
    %106 = vmatmul.mubr.f32.gmra.mrb[0].mxu0 %v39
    %v107 = vpop.f32.mrb[0].mxu0
    %v108 = vadd.f32 %v35, %v107
    %v109 = vpop.f32.mrb[0].mxu0
    %110 = vdwg.mxu0
    %v111 = vmax.f32 %v108, 0.0
    %v112 = vld [vmem:[%s3] sm:$0xff]
    %v113 = vld [vmem:[%s3 + $0x8] sm:$0xff]
    %v114 = vld [vmem:[%s3 + $0x10] sm:$0xff]
    %v115 = vld [vmem:[%s3 + $0x18] sm:$0xff]
    %v116 = vld [vmem:[%s3 + $0x20] sm:$0xff]
    %v117 = vld [vmem:[%s3 + $0x28] sm:$0xff]
    %v118 = vld [vmem:[%s3 + $0x30] sm:$0xff]
    %v119 = vld [vmem:[%s3 + $0x38] sm:$0xff]
    %v120 = vld [vmem:[%s4] sm:$0x1]
    %v122 = vlaneseq
    %v123 = vshrl.u32 %v122, 7
    %v124 = vsub.s32 0, %v123
    %v125 = vrot.slane %v120, %v124
    %v128 = vsel %vm37, %v111, 0
    %130 = vmatprep.subr.mxu0 0.0
    %131 = vmatpush1.msra.mxu0 %v112
    %132 = vmatprep.subr.mxu0 0.0
    %133 = vmatpush1.msra.mxu0 %v113
    %134 = vmatprep.subr.mxu0 0.0
    %135 = vmatpush1.msra.mxu0 %v114
    %136 = vmatprep.subr.mxu0 0.0
    %137 = vmatpush1.msra.mxu0 %v115
    %138 = vmatprep.subr.mxu0 0.0
    %139 = vmatpush1.msra.mxu0 %v116
    %140 = vmatprep.subr.mxu0 0.0
    %141 = vmatpush1.msra.mxu0 %v117
    %142 = vmatprep.subr.mxu0 0.0
    %143 = vmatpush1.msra.mxu0 %v118
    %144 = vmatprep.subr.mxu0 0.0
    %145 = vmatpush1.msra.mxu0 %v119
    %146 = vmatprep.subr.mxu0 0.0
    %147 = vmatpush1.msra.mxu0 0.0
    %148 = vmatprep.subr.mxu0 0.0
    %149 = vmatpush1.msra.mxu0 0.0
    %150 = vmatprep.subr.mxu0 0.0
    %151 = vmatpush1.msra.mxu0 0.0
    %152 = vmatprep.subr.mxu0 0.0
    %153 = vmatpush1.msra.mxu0 0.0
    %154 = vmatprep.subr.mxu0 0.0
    %155 = vmatpush1.msra.mxu0 0.0
    %156 = vmatprep.subr.mxu0 0.0
    %157 = vmatpush1.msra.mxu0 0.0
    %158 = vmatprep.subr.mxu0 0.0
    %159 = vmatpush1.msra.mxu0 0.0
    %160 = vmatprep.subr.mxu0 0.0
    %161 = vmatpush1.msra.mxu0 0.0
    %162 = vmatprep.subr.mxu0 0.0
    %163 = vmatpush1.msra.mxu0 0.0
    %164 = vmatprep.subr.mxu0 0.0
    %165 = vmatpush1.msra.mxu0 0.0
    %166 = vmatprep.subr.mxu0 0.0
    %167 = vmatpush1.msra.mxu0 0.0
    %168 = vmatprep.subr.mxu0 0.0
    %169 = vmatpush1.msra.mxu0 0.0
    %170 = vmatprep.subr.mxu0 0.0
    %171 = vmatpush1.msra.mxu0 0.0
    %172 = vmatprep.subr.mxu0 0.0
    %173 = vmatpush1.msra.mxu0 0.0
    %174 = vmatprep.subr.mxu0 0.0
    %175 = vmatpush1.msra.mxu0 0.0
    %176 = vmatprep.subr.mxu0 0.0
    %177 = vmatpush1.msra.mxu0 0.0
    %178 = vmatprep.subr.mxu0 0.0
    %179 = vmatpush1.msra.mxu0 0.0
    %180 = vmatprep.subr.mxu0 0.0
    %181 = vmatpush1.msra.mxu0 0.0
    %182 = vmatprep.subr.mxu0 0.0
    %183 = vmatpush1.msra.mxu0 0.0
    %184 = vmatprep.subr.mxu0 0.0
    %185 = vmatpush1.msra.mxu0 0.0
    %186 = vmatprep.subr.mxu0 0.0
    %187 = vmatpush1.msra.mxu0 0.0
    %188 = vmatprep.subr.mxu0 0.0
    %189 = vmatpush1.msra.mxu0 0.0
    %190 = vmatprep.subr.mxu0 0.0
    %191 = vmatpush1.msra.mxu0 0.0
    %192 = vmatprep.subr.mxu0 0.0
    %193 = vmatpush1.msra.mxu0 0.0
    %194 = vmatprep.mubr.f32.mxu0 0.0
    %195 = vmatmul.mubr.f32.gmra.mrb[0].mxu0 %v128
    %v196 = vpop.f32.mrb[0].mxu0
    %v197 = vadd.f32 %v125, %v196
    %v198 = vpop.f32.mrb[0].mxu0
    %199 = vdwg.mxu0
    %200 = vst.msk [vmem:[#allocation2] sm:$0xff] %vm37, %v197
    // Predicated region
    $region22: #{triples_mlp_forward.1} parent=1 // pred_check
      _
    $region23: #{triples_mlp_forward.1} parent=1 // pred_check_branch
      %202 = sbr.rel (0) target = $region25
    $region24: #{triples_mlp_forward.1} parent=1 // pred_region
      %s204 = ssub.s32 128, 128
      %205 = vsyncadd [#allocation3], %s204
      %s207 = sshll.u32 [#allocation2], 4
      %s208 = int_to_ptr.vmem [resolvable:$true] %s207
      %210 = dma.vmem_to_hbm [thread:$0]  %s208, 128, %s5, [#allocation3]
    $region25: #{triples_mlp_forward.1} parent=1 // pred_fallthru
      _
    // Predicated region
    $region26: #{triples_mlp_forward.1} parent=1 // pred_check
      _
    $region27: #{triples_mlp_forward.1} parent=1 // pred_check_branch
      %212 = sbr.rel (0) target = $region29
    $region28: #{triples_mlp_forward.1} parent=1 // pred_region
      %213 = dma.done [#allocation3], 128
    $region29: #{triples_mlp_forward.1} parent=1 // pred_fallthru
      _
    %214 = vsyncpa [#allocation3], 1

</llo_original>
